<compile_context>
chip_gen: v7x
topology: tpu7x:2x2x1
jax: 0.10.0
libtpu: 0.0.40
codegen_flags: <defaults>
</compile_context>

<pallas_src>
from typing import Dict, List, Optional

import jax
import jax.numpy as jnp
from jax.experimental import pallas as pl
from jax.experimental.pallas import tpu as pltpu


_LANE = 128
_SUBLANE = 8


def _round_up(x: int, m: int) -> int:
    return ((x + m - 1) // m) * m


def _row_tile(n_rows: int) -> int:
    # Multiple of 8 sublanes; capped at 512 so (in + out) double-buffered 128-wide
    # f32 tiles plus the resident weight slabs stay far below the v7x scoped-VMEM
    # default (32 MiB) and physical VMEM (64 MiB).
    return min(512, _round_up(max(n_rows, 1), _SUBLANE))


def _pad2(a, rows: int, cols: int):
    return jnp.pad(a, ((0, rows - a.shape[0]), (0, cols - a.shape[1])))


_COMPILER_PARAMS = pltpu.CompilerParams(
    dimension_semantics=("parallel", "parallel"),   # (fragment axis, row-tile axis)
    vmem_limit_bytes=32 * 1024 * 1024,              # sized against v7x, not v6e
)


# ---------------------------------------------------------------------------
# Pallas kernels
# ---------------------------------------------------------------------------
def _mlp2_kernel(x_ref, w1_ref, b1_ref, w2_ref, b2_ref, o_ref):
    # y = swish(x @ W1 + b1) @ W2 + b2, f32 accumulation on the MXU.
    h = jnp.dot(x_ref[...], w1_ref[...], preferred_element_type=jnp.float32) + b1_ref[...]
    h = h * jax.nn.sigmoid(h)                              # swish / SiLU
    y = jnp.dot(h, w2_ref[...], preferred_element_type=jnp.float32) + b2_ref[...]
    o_ref[...] = y.astype(o_ref.dtype)


def _mlp2_enc_dec_kernel(x_ref, ew1, eb1, ew2, eb2, dw1, db1, dw2, db2,
                         z_ref, o_ref):
    # Fused encode -> decode: z = MLP_enc(x); y = MLP_dec(z). Intermediate z never
    # touches HBM except as the (requested) z output tile.
    h = jnp.dot(x_ref[...], ew1[...], preferred_element_type=jnp.float32) + eb1[...]
    h = h * jax.nn.sigmoid(h)
    z = jnp.dot(h, ew2[...], preferred_element_type=jnp.float32) + eb2[...]
    z_ref[...] = z.astype(z_ref.dtype)
    g = jnp.dot(z, dw1[...], preferred_element_type=jnp.float32) + db1[...]
    g = g * jax.nn.sigmoid(g)
    y = jnp.dot(g, dw2[...], preferred_element_type=jnp.float32) + db2[...]
    o_ref[...] = y.astype(o_ref.dtype)


# ---------------------------------------------------------------------------
# pallas_call wrappers (operands already lane-padded / fragment-stacked)
# ---------------------------------------------------------------------------
def mlp2_batched_pallas(x, w1, b1, w2, b2):
    """Two-layer MLP batched over a leading fragment axis.

    x  : [F, Np, Di]  (Np % row_tile == 0, Di % 128 == 0)
    w1 : [F, Di, H]   b1 : [F, 1, H]
    w2 : [F, H, Do]   b2 : [F, 1, Do]
    returns [F, Np, Do]
    """
    f, np_, di = x.shape
    h = w1.shape[2]
    do = w2.shape[2]
    tm = _row_tile(np_)
    grid = (f, np_ // tm)

    in_specs = [
        pl.BlockSpec((None, tm, di), lambda fi, ri: (fi, ri, 0)),     # x row tile
        pl.BlockSpec((None, di, h), lambda fi, ri: (fi, 0, 0)),       # W1 resident
        pl.BlockSpec((None, 1, h), lambda fi, ri: (fi, 0, 0)),        # b1 resident
        pl.BlockSpec((None, h, do), lambda fi, ri: (fi, 0, 0)),       # W2 resident
        pl.BlockSpec((None, 1, do), lambda fi, ri: (fi, 0, 0)),       # b2 resident
    ]
    out_specs = pl.BlockSpec((None, tm, do), lambda fi, ri: (fi, ri, 0))

    cost = pl.CostEstimate(
        flops=2 * f * np_ * (di * h + h * do),
        transcendentals=f * np_ * h,
        bytes_accessed=4 * (x.size + w1.size + b1.size + w2.size + b2.size
                            + f * np_ * do),
    )
    return pl.pallas_call(
        _mlp2_kernel,
        out_shape=jax.ShapeDtypeStruct((f, np_, do), x.dtype),
        grid=grid,
        in_specs=in_specs,
        out_specs=out_specs,
        compiler_params=_COMPILER_PARAMS,
        cost_estimate=cost,
    )(x, w1, b1, w2, b2)


def mlp2_enc_dec_pallas(x, enc, dec):
    """Fused encode->decode for all fragments in one pallas_call.

    x : [F, Np, Di]; enc/dec dicts hold stacked, padded w1/b1/w2/b2.
    returns (z [F, Np, De], y [F, Np, Do]).
    """
    f, np_, di = x.shape
    he = enc["w1"].shape[2]
    de = enc["w2"].shape[2]
    hd = dec["w1"].shape[2]
    do = dec["w2"].shape[2]
    assert dec["w1"].shape[1] == de
    tm = _row_tile(np_)
    grid = (f, np_ // tm)

    def const(r, c):
        return pl.BlockSpec((None, r, c), lambda fi, ri: (fi, 0, 0))

    in_specs = [
        pl.BlockSpec((None, tm, di), lambda fi, ri: (fi, ri, 0)),
        const(di, he), const(1, he), const(he, de), const(1, de),
        const(de, hd), const(1, hd), const(hd, do), const(1, do),
    ]
    out_specs = (
        pl.BlockSpec((None, tm, de), lambda fi, ri: (fi, ri, 0)),
        pl.BlockSpec((None, tm, do), lambda fi, ri: (fi, ri, 0)),
    )
    cost = pl.CostEstimate(
        flops=2 * f * np_ * (di * he + he * de + de * hd + hd * do),
        transcendentals=f * np_ * (he + hd),
        bytes_accessed=4 * (x.size
                            + sum(v.size for v in enc.values())
                            + sum(v.size for v in dec.values())
                            + f * np_ * (de + do)),
    )
    return pl.pallas_call(
        _mlp2_enc_dec_kernel,
        out_shape=(jax.ShapeDtypeStruct((f, np_, de), x.dtype),
                   jax.ShapeDtypeStruct((f, np_, do), x.dtype)),
        grid=grid,
        in_specs=in_specs,
        out_specs=out_specs,
        compiler_params=_COMPILER_PARAMS,
        cost_estimate=cost,
    )(x, enc["w1"], enc["b1"], enc["w2"], enc["b2"],
      dec["w1"], dec["b1"], dec["w2"], dec["b2"])


# ---------------------------------------------------------------------------
# Pure-JAX reference + parameter init (PyTorch nn.Linear default init)
# ---------------------------------------------------------------------------
def mlp2_ref(x, w1, b1, w2, b2):
    h = x.astype(jnp.float32) @ w1 + b1
    h = h * jax.nn.sigmoid(h)
    return h @ w2 + b2


def _init_linear(key, fan_in, fan_out):
    kw, kb = jax.random.split(key)
    bound = 1.0 / jnp.sqrt(fan_in)
    w = jax.random.uniform(kw, (fan_in, fan_out), jnp.float32, -bound, bound)
    b = jax.random.uniform(kb, (fan_out,), jnp.float32, -bound, bound)
    return w, b


def _init_mlp2(key, in_dim, hid_dim, out_dim):
    k1, k2 = jax.random.split(key)
    w1, b1 = _init_linear(k1, in_dim, hid_dim)
    w2, b2 = _init_linear(k2, hid_dim, out_dim)
    return dict(w1=w1, b1=b1, w2=w2, b2=b2)


def _pad_mlp(p, d_in_pad, h_pad, d_out_pad):
    """Zero-pad an MLP's params to lane-dense shapes; bias stored as [1, H] f32."""
    return dict(
        w1=_pad2(p["w1"], d_in_pad, h_pad),
        b1=_pad2(p["b1"].reshape(1, -1), 1, h_pad),
        w2=_pad2(p["w2"], h_pad, d_out_pad),
        b2=_pad2(p["b2"].reshape(1, -1), 1, d_out_pad),
    )


def _stack_mlps(plist):
    return {k: jnp.stack([p[k] for p in plist]) for k in ("w1", "b1", "w2", "b2")}


# ---------------------------------------------------------------------------
# BaseDynamics (JAX/Pallas version of the encoder/decoder machinery)
# ---------------------------------------------------------------------------
class BaseDynamicsPallas:
    def __init__(
        self,
        model_config: Dict,
        fragment_names: List[str],
        node_nfs: List[int],
        edge_nf: int,
        condition_nf: int = 0,
        pos_dim: int = 3,
        update_pocket_coords: bool = True,
        condition_time: bool = True,
        edge_cutoff: Optional[float] = None,
        enforce_same_encoding: Optional[List] = None,
        seed: int = 0,
    ):
        assert len(node_nfs) == len(fragment_names)
        for nf in node_nfs:
            assert nf > pos_dim
        if "act_fn" not in model_config:
            model_config["act_fn"] = "swish"
        if "in_node_nf" not in model_config:
            model_config["in_node_nf"] = model_config["in_hidden_channels"]
        self.model_config = model_config
        self.node_nfs = node_nfs
        self.edge_nf = edge_nf
        self.condition_nf = condition_nf
        self.fragment_names = fragment_names
        self.pos_dim = pos_dim
        self.update_pocket_coords = update_pocket_coords
        self.condition_time = condition_time
        self.edge_cutoff = edge_cutoff

        # TODO(synk): the equivariant backbone (`self.model = model(**model_config)`,
        # EGNN / LEFTNet) is an external module with no spec here; only the
        # BaseDynamics-owned encoder/decoder MLPs are implemented.
        self.dist_dim = 0
        self.embed_dim = model_config["in_node_nf"]
        self.edge_embed_dim = model_config.get("in_edge_nf", 0)
        if condition_time:
            self.embed_dim -= 1
        if condition_nf > 0:
            self.embed_dim -= condition_nf
        assert self.embed_dim > 0

        n_frag = len(fragment_names)
        self.in_dims = [n - pos_dim for n in node_nfs]
        self.hid_dims = [2 * d for d in self.in_dims]

        # Raw (unpadded) params -- also used by the pure-JAX reference check.
        key = jax.random.PRNGKey(seed)
        self.encoders, self.decoders = [], []
        for ii in range(n_frag):
            key, ke, kd = jax.random.split(key, 3)
            self.encoders.append(
                _init_mlp2(ke, self.in_dims[ii], self.hid_dims[ii], self.embed_dim))
            self.decoders.append(
                _init_mlp2(kd, self.embed_dim, self.hid_dims[ii], self.in_dims[ii]))
        if enforce_same_encoding is not None:
            for ii in enforce_same_encoding:
                self.encoders[ii] = self.encoders[0]
                self.decoders[ii] = self.decoders[0]

        if self.edge_embed_dim > 0:
            key, ke, kd = jax.random.split(key, 3)
            self.edge_encoder = _init_mlp2(ke, edge_nf, 2 * edge_nf, self.edge_embed_dim)
            self.edge_decoder = _init_mlp2(
                kd, self.edge_embed_dim + self.dist_dim, 2 * edge_nf, edge_nf)
        else:
            self.edge_encoder, self.edge_decoder = None, None

        # Lane-dense, fragment-stacked parameter slabs (built once at init).
        self.din_pad = _round_up(max(self.in_dims), _LANE)
        self.hid_pad = _round_up(max(self.hid_dims), _LANE)
        self.emb_pad = _round_up(self.embed_dim, _LANE)
        self._enc = _stack_mlps(
            [_pad_mlp(p, self.din_pad, self.hid_pad, self.emb_pad) for p in self.encoders])
        self._dec = _stack_mlps(
            [_pad_mlp(p, self.emb_pad, self.hid_pad, self.din_pad) for p in self.decoders])
        # Per-fragment views sliced once here (avoids per-call slice ops).
        self._enc_by_frag = [{k: v[i:i + 1] for k, v in self._enc.items()}
                             for i in range(n_frag)]
        self._dec_by_frag = [{k: v[i:i + 1] for k, v in self._dec.items()}
                             for i in range(n_frag)]

        if self.edge_embed_dim > 0:
            self.e_in_pad = _round_up(edge_nf, _LANE)
            self.e_hid_pad = _round_up(2 * edge_nf, _LANE)
            self.e_emb_pad = _round_up(self.edge_embed_dim + self.dist_dim, _LANE)
            self._edge_enc = _stack_mlps(
                [_pad_mlp(self.edge_encoder, self.e_in_pad, self.e_hid_pad, self.e_emb_pad)])
            self._edge_dec = _stack_mlps(
                [_pad_mlp(self.edge_decoder, self.e_emb_pad, self.e_hid_pad, self.e_in_pad)])
        else:
            self._edge_enc, self._edge_dec = None, None

    # -- input packing: pad rows to the row-tile and features to 128 lanes ----
    @staticmethod
    def _stack_inputs(xs, d_pad):
        n_max = max(x.shape[0] for x in xs)
        n_pad = _round_up(n_max, _row_tile(n_max))
        return jnp.stack([_pad2(x.astype(jnp.float32), n_pad, d_pad) for x in xs])

    # -- batched (all-fragment) paths -----------------------------------------
    def encode_all(self, h_list):
        x = self._stack_inputs(h_list, self.din_pad)
        z = mlp2_batched_pallas(x, self._enc["w1"], self._enc["b1"],
                                self._enc["w2"], self._enc["b2"])
        return [z[i, : h.shape[0], : self.embed_dim] for i, h in enumerate(h_list)]

    def decode_all(self, z_list):
        x = self._stack_inputs(z_list, self.emb_pad)
        y = mlp2_batched_pallas(x, self._dec["w1"], self._dec["b1"],
                                self._dec["w2"], self._dec["b2"])
        return [y[i, : z.shape[0], : self.in_dims[i]] for i, z in enumerate(z_list)]

    def encode_decode_all(self, h_list):
        """Fused encode -> decode round trip for all fragments in ONE pallas_call."""
        x = self._stack_inputs(h_list, self.din_pad)
        z, y = mlp2_enc_dec_pallas(x, self._enc, self._dec)
        zs = [z[i, : h.shape[0], : self.embed_dim] for i, h in enumerate(h_list)]
        ys = [y[i, : h.shape[0], : self.in_dims[i]] for i, h in enumerate(h_list)]
        return zs, ys

    # -- standalone per-fragment / edge paths ----------------------------------
    def encode(self, ii: int, h):
        x = self._stack_inputs([h], self.din_pad)
        p = self._enc_by_frag[ii]
        z = mlp2_batched_pallas(x, p["w1"], p["b1"], p["w2"], p["b2"])
        return z[0, : h.shape[0], : self.embed_dim]

    def decode(self, ii: int, z):
        x = self._stack_inputs([z], self.emb_pad)
        p = self._dec_by_frag[ii]
        y = mlp2_batched_pallas(x, p["w1"], p["b1"], p["w2"], p["b2"])
        return y[0, : z.shape[0], : self.in_dims[ii]]

    def encode_edge(self, e):
        x = self._stack_inputs([e], self.e_in_pad)
        p = self._edge_enc
        z = mlp2_batched_pallas(x, p["w1"], p["b1"], p["w2"], p["b2"])
        return z[0, : e.shape[0], : self.edge_embed_dim]

    def decode_edge(self, ez):
        x = self._stack_inputs([ez], self.e_emb_pad)
        p = self._edge_dec
        y = mlp2_batched_pallas(x, p["w1"], p["b1"], p["w2"], p["b2"])
        return y[0, : ez.shape[0], : self.edge_nf]

    def encode_decode_edge(self, e):
        x = self._stack_inputs([e], self.e_in_pad)
        z, y = mlp2_enc_dec_pallas(x, self._edge_enc, self._edge_dec)
        return (z[0, : e.shape[0], : self.edge_embed_dim],
                y[0, : e.shape[0], : self.edge_nf])

    def forward(self):
        # Mirrors the reference: BaseDynamics.forward() is abstract.
        raise NotImplementedError


# ---------------------------------------------------------------------------
if __name__ == "__main__":
    # Small, module-consistent configuration.
    model_config = {"in_hidden_channels": 33, "in_edge_nf": 16, "act_fn": "swish"}
    fragment_names = ["reactant", "product"]
    node_nfs = [11, 11]          # node feature sizes (> pos_dim)
    edge_nf = 4
    pos_dim = 3                  # embed_dim = 33 - 1 (time) = 32; per-frag in_dim = 8

    dyn = BaseDynamicsPallas(
        model_config, fragment_names, node_nfs, edge_nf,
        condition_nf=0, pos_dim=pos_dim, condition_time=True, seed=0,
    )

    key = jax.random.PRNGKey(0)
    k_h0, k_h1, k_e = jax.random.split(key, 3)
    n_nodes, n_edges = 8, 8
    h_list = [
        jax.random.normal(k_h0, (n_nodes, node_nfs[0] - pos_dim), jnp.float32),
        jax.random.normal(k_h1, (n_nodes, node_nfs[1] - pos_dim), jnp.float32),
    ]
    e_attr = jax.random.normal(k_e, (n_edges, edge_nf), jnp.float32)

    # Fused encode->decode for both fragments in a single pallas_call,
    # fused edge encode->decode in another, plus the standalone paths.
    z_list, h_rec_list = dyn.encode_decode_all(h_list)
    ez, e_rec = dyn.encode_decode_edge(e_attr)
    z0 = dyn.encode(0, h_list[0])
    h0_rec = dyn.decode(0, z_list[0])
    jax.block_until_ready((z_list, h_rec_list, ez, e_rec, z0, h0_rec))

    ok = True
    for ii, h in enumerate(h_list):
        pe, pd = dyn.encoders[ii], dyn.decoders[ii]
        z_ref = mlp2_ref(h, pe["w1"], pe["b1"], pe["w2"], pe["b2"])
        h_ref = mlp2_ref(z_ref, pd["w1"], pd["b1"], pd["w2"], pd["b2"])
        ok &= bool(jnp.allclose(z_list[ii], z_ref, atol=1e-5, rtol=1e-5))
        ok &= bool(jnp.allclose(h_rec_list[ii], h_ref, atol=1e-5, rtol=1e-5))

    pe, pd = dyn.edge_encoder, dyn.edge_decoder
    ez_ref = mlp2_ref(e_attr, pe["w1"], pe["b1"], pe["w2"], pe["b2"])
    e_ref = mlp2_ref(ez_ref, pd["w1"], pd["b1"], pd["w2"], pd["b2"])
    ok &= bool(jnp.allclose(ez, ez_ref, atol=1e-5, rtol=1e-5))
    ok &= bool(jnp.allclose(e_rec, e_ref, atol=1e-5, rtol=1e-5))

    pe0, pd0 = dyn.encoders[0], dyn.decoders[0]
    z0_ref = mlp2_ref(h_list[0], pe0["w1"], pe0["b1"], pe0["w2"], pe0["b2"])
    h0_ref = mlp2_ref(z0_ref, pd0["w1"], pd0["b1"], pd0["w2"], pd0["b2"])
    ok &= bool(jnp.allclose(z0, z0_ref, atol=1e-5, rtol=1e-5))
    ok &= bool(jnp.allclose(h0_rec, h0_ref, atol=1e-5, rtol=1e-5))

    assert ok, "Pallas kernel mismatch vs. pure-JAX reference"
    print("KERNEL_OK")
</pallas_src>

<mosaic_0001>
module attributes {stable_mosaic.version = 11 : i64} {
  func.func @_mlp2_enc_dec_kernel(%arg0: i32, %arg1: i32, %arg2: memref<1x8x128xf32, #tpu.memory_space<vmem>>, %arg3: memref<1x128x128xf32, #tpu.memory_space<vmem>>, %arg4: memref<1x1x128xf32, #tpu.memory_space<vmem>>, %arg5: memref<1x128x128xf32, #tpu.memory_space<vmem>>, %arg6: memref<1x1x128xf32, #tpu.memory_space<vmem>>, %arg7: memref<1x128x128xf32, #tpu.memory_space<vmem>>, %arg8: memref<1x1x128xf32, #tpu.memory_space<vmem>>, %arg9: memref<1x128x128xf32, #tpu.memory_space<vmem>>, %arg10: memref<1x1x128xf32, #tpu.memory_space<vmem>>, %arg11: memref<1x8x128xf32, #tpu.memory_space<vmem>>, %arg12: memref<1x8x128xf32, #tpu.memory_space<vmem>>) attributes {dimension_semantics = [#tpu.dimension_semantics<parallel>, #tpu.dimension_semantics<parallel>], iteration_bounds = array<i64: 2, 1>, scalar_prefetch = 0 : i64, scratch_operands = 0 : i64, tpu.core_type = #tpu.core_type<tc>, window_params = [{transform_indices = @transform_0, window_bounds = array<i64: 1, 8, 128>}, {transform_indices = @transform_1, window_bounds = array<i64: 1, 128, 128>}, {transform_indices = @transform_2, window_bounds = array<i64: 1, 1, 128>}, {transform_indices = @transform_3, window_bounds = array<i64: 1, 128, 128>}, {transform_indices = @transform_4, window_bounds = array<i64: 1, 1, 128>}, {transform_indices = @transform_5, window_bounds = array<i64: 1, 128, 128>}, {transform_indices = @transform_6, window_bounds = array<i64: 1, 1, 128>}, {transform_indices = @transform_7, window_bounds = array<i64: 1, 128, 128>}, {transform_indices = @transform_8, window_bounds = array<i64: 1, 1, 128>}, {transform_indices = @transform_9, window_bounds = array<i64: 1, 8, 128>}, {transform_indices = @transform_10, window_bounds = array<i64: 1, 8, 128>}]} {
    %c0 = arith.constant 0 : index
    %c0_0 = arith.constant 0 : index
    %c0_1 = arith.constant 0 : index
    %0 = vector.load %arg2[%c0, %c0_0, %c0_1] : memref<1x8x128xf32, #tpu.memory_space<vmem>>, vector<1x8x128xf32>
    %1 = vector.shape_cast %0 : vector<1x8x128xf32> to vector<8x128xf32>
    %c0_2 = arith.constant 0 : index
    %c0_3 = arith.constant 0 : index
    %c0_4 = arith.constant 0 : index
    %2 = vector.load %arg3[%c0_2, %c0_3, %c0_4] : memref<1x128x128xf32, #tpu.memory_space<vmem>>, vector<1x128x128xf32>
    %3 = vector.shape_cast %2 : vector<1x128x128xf32> to vector<128x128xf32>
    %cst = arith.constant dense<0.000000e+00> : vector<8x128xf32>
    %4 = tpu.matmul %1, %3, %cst {dimension_numbers = #tpu.dot_dimension_numbers<[1], [0], [0], [1], [0, 0, 1, 1], [], []>} : vector<8x128xf32>, vector<128x128xf32>, vector<8x128xf32> -> vector<8x128xf32>
    %c0_5 = arith.constant 0 : index
    %c0_6 = arith.constant 0 : index
    %c0_7 = arith.constant 0 : index
    %5 = vector.load %arg4[%c0_5, %c0_6, %c0_7] : memref<1x1x128xf32, #tpu.memory_space<vmem>>, vector<1x1x128xf32>
    %6 = vector.shape_cast %5 : vector<1x1x128xf32> to vector<1x128xf32>
    %7 = vector.broadcast %6 : vector<1x128xf32> to vector<8x128xf32>
    %8 = arith.addf %4, %7 : vector<8x128xf32>
    %9 = arith.negf %8 : vector<8x128xf32>
    %10 = math.exp %9 : vector<8x128xf32>
    %cst_8 = arith.constant 1.000000e+00 : f32
    %11 = vector.broadcast %cst_8 : f32 to vector<8x128xf32>
    %12 = arith.addf %11, %10 : vector<8x128xf32>
    %13 = arith.divf %11, %12 : vector<8x128xf32>
    %14 = arith.mulf %8, %13 : vector<8x128xf32>
    %c0_9 = arith.constant 0 : index
    %c0_10 = arith.constant 0 : index
    %c0_11 = arith.constant 0 : index
    %15 = vector.load %arg5[%c0_9, %c0_10, %c0_11] : memref<1x128x128xf32, #tpu.memory_space<vmem>>, vector<1x128x128xf32>
    %16 = vector.shape_cast %15 : vector<1x128x128xf32> to vector<128x128xf32>
    %cst_12 = arith.constant dense<0.000000e+00> : vector<8x128xf32>
    %17 = tpu.matmul %14, %16, %cst_12 {dimension_numbers = #tpu.dot_dimension_numbers<[1], [0], [0], [1], [0, 0, 1, 1], [], []>} : vector<8x128xf32>, vector<128x128xf32>, vector<8x128xf32> -> vector<8x128xf32>
    %c0_13 = arith.constant 0 : index
    %c0_14 = arith.constant 0 : index
    %c0_15 = arith.constant 0 : index
    %18 = vector.load %arg6[%c0_13, %c0_14, %c0_15] : memref<1x1x128xf32, #tpu.memory_space<vmem>>, vector<1x1x128xf32>
    %19 = vector.shape_cast %18 : vector<1x1x128xf32> to vector<1x128xf32>
    %20 = vector.broadcast %19 : vector<1x128xf32> to vector<8x128xf32>
    %21 = arith.addf %17, %20 : vector<8x128xf32>
    %c0_16 = arith.constant 0 : index
    %c0_17 = arith.constant 0 : index
    %c0_18 = arith.constant 0 : index
    %22 = vector.load %arg11[%c0_16, %c0_17, %c0_18] : memref<1x8x128xf32, #tpu.memory_space<vmem>>, vector<1x8x128xf32>
    %23 = vector.shape_cast %22 : vector<1x8x128xf32> to vector<8x128xf32>
    %24 = vector.shape_cast %21 : vector<8x128xf32> to vector<1x8x128xf32>
    tpu.vector_store %arg11[%c0_16, %c0_17, %c0_18], %24 {strides = array<i32>} : memref<1x8x128xf32, #tpu.memory_space<vmem>>, vector<1x8x128xf32>,
    %c0_19 = arith.constant 0 : index
    %c0_20 = arith.constant 0 : index
    %c0_21 = arith.constant 0 : index
    %25 = vector.load %arg7[%c0_19, %c0_20, %c0_21] : memref<1x128x128xf32, #tpu.memory_space<vmem>>, vector<1x128x128xf32>
    %26 = vector.shape_cast %25 : vector<1x128x128xf32> to vector<128x128xf32>
    %cst_22 = arith.constant dense<0.000000e+00> : vector<8x128xf32>
    %27 = tpu.matmul %21, %26, %cst_22 {dimension_numbers = #tpu.dot_dimension_numbers<[1], [0], [0], [1], [0, 0, 1, 1], [], []>} : vector<8x128xf32>, vector<128x128xf32>, vector<8x128xf32> -> vector<8x128xf32>
    %c0_23 = arith.constant 0 : index
    %c0_24 = arith.constant 0 : index
    %c0_25 = arith.constant 0 : index
    %28 = vector.load %arg8[%c0_23, %c0_24, %c0_25] : memref<1x1x128xf32, #tpu.memory_space<vmem>>, vector<1x1x128xf32>
    %29 = vector.shape_cast %28 : vector<1x1x128xf32> to vector<1x128xf32>
    %30 = vector.broadcast %29 : vector<1x128xf32> to vector<8x128xf32>
    %31 = arith.addf %27, %30 : vector<8x128xf32>
    %32 = arith.negf %31 : vector<8x128xf32>
    %33 = math.exp %32 : vector<8x128xf32>
    %cst_26 = arith.constant 1.000000e+00 : f32
    %34 = vector.broadcast %cst_26 : f32 to vector<8x128xf32>
    %35 = arith.addf %34, %33 : vector<8x128xf32>
    %36 = arith.divf %34, %35 : vector<8x128xf32>
    %37 = arith.mulf %31, %36 : vector<8x128xf32>
    %c0_27 = arith.constant 0 : index
    %c0_28 = arith.constant 0 : index
    %c0_29 = arith.constant 0 : index
    %38 = vector.load %arg9[%c0_27, %c0_28, %c0_29] : memref<1x128x128xf32, #tpu.memory_space<vmem>>, vector<1x128x128xf32>
    %39 = vector.shape_cast %38 : vector<1x128x128xf32> to vector<128x128xf32>
    %cst_30 = arith.constant dense<0.000000e+00> : vector<8x128xf32>
    %40 = tpu.matmul %37, %39, %cst_30 {dimension_numbers = #tpu.dot_dimension_numbers<[1], [0], [0], [1], [0, 0, 1, 1], [], []>} : vector<8x128xf32>, vector<128x128xf32>, vector<8x128xf32> -> vector<8x128xf32>
    %c0_31 = arith.constant 0 : index
    %c0_32 = arith.constant 0 : index
    %c0_33 = arith.constant 0 : index
    %41 = vector.load %arg10[%c0_31, %c0_32, %c0_33] : memref<1x1x128xf32, #tpu.memory_space<vmem>>, vector<1x1x128xf32>
    %42 = vector.shape_cast %41 : vector<1x1x128xf32> to vector<1x128xf32>
    %43 = vector.broadcast %42 : vector<1x128xf32> to vector<8x128xf32>
    %44 = arith.addf %40, %43 : vector<8x128xf32>
    %c0_34 = arith.constant 0 : index
    %c0_35 = arith.constant 0 : index
    %c0_36 = arith.constant 0 : index
    %45 = vector.load %arg12[%c0_34, %c0_35, %c0_36] : memref<1x8x128xf32, #tpu.memory_space<vmem>>, vector<1x8x128xf32>
    %46 = vector.shape_cast %45 : vector<1x8x128xf32> to vector<8x128xf32>
    %47 = vector.shape_cast %44 : vector<8x128xf32> to vector<1x8x128xf32>
    tpu.vector_store %arg12[%c0_34, %c0_35, %c0_36], %47 {strides = array<i32>} : memref<1x8x128xf32, #tpu.memory_space<vmem>>, vector<1x8x128xf32>,
    return
  }
  func.func @transform_0(%arg0: i32, %arg1: i32) -> (i32, i32, i32) {
    %c0_i32 = arith.constant 0 : i32
    %c0_i32_0 = arith.constant 0 : i32
    return %arg0, %arg1, %c0_i32 : i32, i32, i32
  }
  func.func @transform_1(%arg0: i32, %arg1: i32) -> (i32, i32, i32) {
    %c0_i32 = arith.constant 0 : i32
    %c0_i32_0 = arith.constant 0 : i32
    %c0_i32_1 = arith.constant 0 : i32
    return %arg0, %c0_i32, %c0_i32_0 : i32, i32, i32
  }
  func.func @transform_2(%arg0: i32, %arg1: i32) -> (i32, i32, i32) {
    %c0_i32 = arith.constant 0 : i32
    %c0_i32_0 = arith.constant 0 : i32
    %c0_i32_1 = arith.constant 0 : i32
    return %arg0, %c0_i32, %c0_i32_0 : i32, i32, i32
  }
  func.func @transform_3(%arg0: i32, %arg1: i32) -> (i32, i32, i32) {
    %c0_i32 = arith.constant 0 : i32
    %c0_i32_0 = arith.constant 0 : i32
    %c0_i32_1 = arith.constant 0 : i32
    return %arg0, %c0_i32, %c0_i32_0 : i32, i32, i32
  }
  func.func @transform_4(%arg0: i32, %arg1: i32) -> (i32, i32, i32) {
    %c0_i32 = arith.constant 0 : i32
    %c0_i32_0 = arith.constant 0 : i32
    %c0_i32_1 = arith.constant 0 : i32
    return %arg0, %c0_i32, %c0_i32_0 : i32, i32, i32
  }
  func.func @transform_5(%arg0: i32, %arg1: i32) -> (i32, i32, i32) {
    %c0_i32 = arith.constant 0 : i32
    %c0_i32_0 = arith.constant 0 : i32
    %c0_i32_1 = arith.constant 0 : i32
    return %arg0, %c0_i32, %c0_i32_0 : i32, i32, i32
  }
  func.func @transform_6(%arg0: i32, %arg1: i32) -> (i32, i32, i32) {
    %c0_i32 = arith.constant 0 : i32
    %c0_i32_0 = arith.constant 0 : i32
    %c0_i32_1 = arith.constant 0 : i32
    return %arg0, %c0_i32, %c0_i32_0 : i32, i32, i32
  }
  func.func @transform_7(%arg0: i32, %arg1: i32) -> (i32, i32, i32) {
    %c0_i32 = arith.constant 0 : i32
    %c0_i32_0 = arith.constant 0 : i32
    %c0_i32_1 = arith.constant 0 : i32
    return %arg0, %c0_i32, %c0_i32_0 : i32, i32, i32
  }
  func.func @transform_8(%arg0: i32, %arg1: i32) -> (i32, i32, i32) {
    %c0_i32 = arith.constant 0 : i32
    %c0_i32_0 = arith.constant 0 : i32
    %c0_i32_1 = arith.constant 0 : i32
    return %arg0, %c0_i32, %c0_i32_0 : i32, i32, i32
  }
  func.func @transform_9(%arg0: i32, %arg1: i32) -> (i32, i32, i32) {
    %c0_i32 = arith.constant 0 : i32
    %c0_i32_0 = arith.constant 0 : i32
    return %arg0, %arg1, %c0_i32 : i32, i32, i32
  }
  func.func @transform_10(%arg0: i32, %arg1: i32) -> (i32, i32, i32) {
    %c0_i32 = arith.constant 0 : i32
    %c0_i32_0 = arith.constant 0 : i32
    return %arg0, %arg1, %c0_i32 : i32, i32, i32
  }
}

</mosaic_0001>

<llo_original>
// kernel: tpu_custom_call.1
$region0: #{tpu_custom_call.1}
  #allocation0 [shape = 'u32[]', space=smem, size = 0x4, offset = 0x4, fixed_abs, tag = 'smem constant byte address 0x4 - core index']
  #allocation1 [shape = 'u32[144,128]{1,0:T(1,128)}', space=vmem, size = 0x12000, scoped, tag = 'internal scratch']
  %s0 = inlined_call_operand.hbm [shape: f32[2,8,128], index: 0, kind: input, shape index: {}]
  %s1 = inlined_call_operand.hbm [shape: f32[2,128,128], index: 1, kind: input, shape index: {}]
  %s2 = inlined_call_operand.vmem [shape: f32[2,1,128], index: 2, kind: input, shape index: {}]
  %s3 = inlined_call_operand.hbm [shape: f32[2,128,128], index: 3, kind: input, shape index: {}]
  %s4 = inlined_call_operand.vmem [shape: f32[2,1,128], index: 4, kind: input, shape index: {}]
  %s5 = inlined_call_operand.hbm [shape: f32[2,128,128], index: 5, kind: input, shape index: {}]
  %s6 = inlined_call_operand.vmem [shape: f32[2,1,128], index: 6, kind: input, shape index: {}]
  %s7 = inlined_call_operand.hbm [shape: f32[2,128,128], index: 7, kind: input, shape index: {}]
  %s8 = inlined_call_operand.vmem [shape: f32[2,1,128], index: 8, kind: input, shape index: {}]
  %s9 = inlined_call_operand.hbm [shape: f32[2,8,128], index: 9, kind: output, shape index: {0}]
  %s10 = inlined_call_operand.hbm [shape: f32[2,8,128], index: 10, kind: output, shape index: {1}]
  %11 = xla_tuple %s9, %s10
  %s12 = sld [smem:[#allocation0]]
  $region97: #{tpu_custom_call.1} parent=0
    _
  %s14 = ssub.s32 1, %s12
  %s15 = scalar_select 0, %s14, %s12
  $region1: #{tpu_custom_call.1} parent=0
    #allocation2 [shape = 'u8[8192]{0}', space=vmem, size = 0x2000, scoped, tag = 'input window, operand 0']
    #allocation3 [shape = 's32[2]{0}', space=sflag, size = 0x8, scoped, tag = 'scoped memory for tpu_custom_call.1']
    #allocation4 [shape = 's32[2]{0}', space=sflag, size = 0x8, scoped, tag = 'scoped memory for tpu_custom_call.1']
    #allocation5 [shape = 'u8[131072]{0}', space=vmem, size = 0x20000, scoped, tag = 'input window, operand 1']
    #allocation6 [shape = 's32[2]{0}', space=sflag, size = 0x8, scoped, tag = 'scoped memory for tpu_custom_call.1']
    #allocation7 [shape = 'u8[131072]{0}', space=vmem, size = 0x20000, scoped, tag = 'input window, operand 3']
    #allocation8 [shape = 'u8[131072]{0}', space=vmem, size = 0x20000, scoped, tag = 'input window, operand 5']
    #allocation9 [shape = 's32[2]{0}', space=sflag, size = 0x8, scoped, tag = 'scoped memory for tpu_custom_call.1']
    #allocation10 [shape = 'u8[131072]{0}', space=vmem, size = 0x20000, scoped, tag = 'input window, operand 7']
    #allocation11 [shape = 'u8[8192]{0}', space=vmem, size = 0x2000, scoped, tag = 'output window, operand 0']
    #allocation12 [shape = 'u8[8192]{0}', space=vmem, size = 0x2000, scoped, tag = 'output window, operand 1']
    #allocation13 [shape = 's32[2]{0}', space=sflag, size = 0x8, scoped, tag = 'scoped memory for tpu_custom_call.1']
    %16 = vsyncpa [#allocation3], 0
    %s17 = scalar_lea.sflag [#allocation3], 1
    %18 = vsyncpa %s17, 0
    %19 = vsyncpa [#allocation6], 0
    %s20 = scalar_lea.sflag [#allocation6], 1
    %21 = vsyncpa %s20, 0
    %22 = vsyncpa [#allocation9], 0
    %s23 = scalar_lea.sflag [#allocation9], 1
    %24 = vsyncpa %s23, 0
    %25 = vsyncpa [#allocation4], 0
    %s26 = scalar_lea.sflag [#allocation4], 1
    %27 = vsyncpa %s26, 0
    %28 = vsyncpa [#allocation13], 0
    %s29 = scalar_lea.sflag [#allocation13], 1
    %30 = vsyncpa %s29, 0
    loop: start=0, step=1, limit=4
    $region2: #{tpu_custom_call.1} parent=1 // loop_pre_header
      _
    $region3: #{tpu_custom_call.1} parent=1 // loop_header
      %s32 = sphi 0, %s36
      %p33 = scmp.ge.s32.totalorder %s32, 4
      %s39 = sphi 0, %s51
      %s40 = sphi 0, %s47
      %s41 = sphi 0, %s39
      %s42 = sphi 0, %s40
      %s43 = sphi 0, %s41
      %s44 = sphi 0, %s42
      %s56 = sphi 0, %s58
      %s59 = sphi 0, %s56
      %s60 = sphi 0, %s59
      %s76 = sphi 0, %s60
      %s82 = sphi 0, %s84
      %s85 = sphi 0, %s82
      %s86 = sphi 0, %s85
      %s102 = sphi 0, %s86
      %s108 = sphi 0, %s110
      %s111 = sphi 0, %s108
      %s112 = sphi 0, %s111
      %s128 = sphi 0, %s112
      %s134 = sphi 0, %s136
      %s137 = sphi 0, %s134
      %s138 = sphi 0, %s137
      %s154 = sphi 0, %s138
      %s160 = sphi 0, %s162
      %s163 = sphi 0, %s160
      %s164 = sphi 0, %s163
      %s180 = sphi 0, %s164
      %s186 = sphi 0, %s188
      %s189 = sphi 0, %s186
      %s190 = sphi 0, %s189
      %s206 = sphi 0, %s190
      %s212 = sphi 0, %s214
      %s215 = sphi 0, %s212
      %s216 = sphi 0, %s215
      %s232 = sphi 0, %s216
      %s238 = sphi 0, %s240
      %s241 = sphi 0, %s238
      %s242 = sphi 0, %s241
      %s258 = sphi 0, %s242
      %s264 = sphi 0, %s266
      %s267 = sphi 0, %s264
      %s268 = sphi 0, %s267
      %s284 = sphi 0, %s268
      %s292 = sphi 0, %s294
      %s295 = sphi 0, %s292
      %s296 = sphi 0, %s295
      %s312 = sphi 0, %s296
      %s320 = sphi 0, %s322
      %s323 = sphi 0, %s320
      %s324 = sphi 0, %s323
      %s340 = sphi 0, %s324
    $region4: #{tpu_custom_call.1} parent=1 // loop_header_branch
      %35 = sbr.rel (%p33) target = $region8
    $region5: #{tpu_custom_call.1} parent=1 // loop_body
      %s37 = ssub.s32 %s32, 1
      %s38 = ssub.s32 %s32, 2
      %s45 = sadd.s32 1, %s40
      %p46 = scmp.ge.s32.totalorder %s45, 1
      %s47 = scalar_select %p46, 0, %s45
      %s48 = sadd.s32 1, %s39
      %s49 = scalar_select %p46, %s48, %s39
      %p50 = scmp.ge.s32.totalorder %s49, 2
      %s51 = scalar_select %p50, 0, %s49
      %s52 = ssub.s32 %s39, %s51
      %s53 = ssub.s32 %s40, %s47
      %s54 = sor.u32 %s52, %s53
      %p55 = scmp.eq.s32.totalorder %s54, 0
      %s57 = sadd.s32 %s56, 1
      %s58 = scalar_select %p55, %s56, %s57
      %p61 = pneg %p55
      %p62 = scmp.eq.s32.totalorder %s32, 1
      %p63 = por %p61, %p62
      %p64 = scmp.ne.s32.totalorder %s56, %s59
      %p65 = scmp.eq.s32.totalorder %s32, 0
      %p66 = por %p64, %p65
      %p67 = scmp.ne.s32.totalorder %s56, %s59
      %p68 = scmp.eq.s32.totalorder %s37, 1
      %p69 = por %p67, %p68
      %p70 = scmp.ne.s32.totalorder %s59, %s60
      %p71 = scmp.eq.s32.totalorder %s37, 0
      %p72 = por %p70, %p71
      %p73 = scmp.ne.s32.totalorder %s59, %s60
      %p74 = scmp.eq.s32.totalorder %s38, 1
      %p75 = por %p73, %p74
      %p77 = scmp.ne.s32.totalorder %s60, %s76
      %p78 = scmp.eq.s32.totalorder %s38, 0
      %p79 = por %p77, %p78
      %s80 = ssub.s32 %s39, %s51
      %p81 = scmp.eq.s32.totalorder %s80, 0
      %s83 = sadd.s32 %s82, 1
      %s84 = scalar_select %p81, %s82, %s83
      %p87 = pneg %p81
      %p88 = scmp.eq.s32.totalorder %s32, 1
      %p89 = por %p87, %p88
      %p90 = scmp.ne.s32.totalorder %s82, %s85
      %p91 = scmp.eq.s32.totalorder %s32, 0
      %p92 = por %p90, %p91
      %p93 = scmp.ne.s32.totalorder %s82, %s85
      %p94 = scmp.eq.s32.totalorder %s37, 1
      %p95 = por %p93, %p94
      %p96 = scmp.ne.s32.totalorder %s85, %s86
      %p97 = scmp.eq.s32.totalorder %s37, 0
      %p98 = por %p96, %p97
      %p99 = scmp.ne.s32.totalorder %s85, %s86
      %p100 = scmp.eq.s32.totalorder %s38, 1
      %p101 = por %p99, %p100
      %p103 = scmp.ne.s32.totalorder %s86, %s102
      %p104 = scmp.eq.s32.totalorder %s38, 0
      %p105 = por %p103, %p104
      %s106 = ssub.s32 %s39, %s51
      %p107 = scmp.eq.s32.totalorder %s106, 0
      %s109 = sadd.s32 %s108, 1
      %s110 = scalar_select %p107, %s108, %s109
      %p113 = pneg %p107
      %p114 = scmp.eq.s32.totalorder %s32, 1
      %p115 = por %p113, %p114
      %p116 = scmp.ne.s32.totalorder %s108, %s111
      %p117 = scmp.eq.s32.totalorder %s32, 0
      %p118 = por %p116, %p117
      %p119 = scmp.ne.s32.totalorder %s108, %s111
      %p120 = scmp.eq.s32.totalorder %s37, 1
      %p121 = por %p119, %p120
      %p122 = scmp.ne.s32.totalorder %s111, %s112
      %p123 = scmp.eq.s32.totalorder %s37, 0
      %p124 = por %p122, %p123
      %p125 = scmp.ne.s32.totalorder %s111, %s112
      %p126 = scmp.eq.s32.totalorder %s38, 1
      %p127 = por %p125, %p126
      %p129 = scmp.ne.s32.totalorder %s112, %s128
      %p130 = scmp.eq.s32.totalorder %s38, 0
      %p131 = por %p129, %p130
      %s132 = ssub.s32 %s39, %s51
      %p133 = scmp.eq.s32.totalorder %s132, 0
      %s135 = sadd.s32 %s134, 1
      %s136 = scalar_select %p133, %s134, %s135
      %p139 = pneg %p133
      %p140 = scmp.eq.s32.totalorder %s32, 1
      %p141 = por %p139, %p140
      %p142 = scmp.ne.s32.totalorder %s134, %s137
      %p143 = scmp.eq.s32.totalorder %s32, 0
      %p144 = por %p142, %p143
      %p145 = scmp.ne.s32.totalorder %s134, %s137
      %p146 = scmp.eq.s32.totalorder %s37, 1
      %p147 = por %p145, %p146
      %p148 = scmp.ne.s32.totalorder %s137, %s138
      %p149 = scmp.eq.s32.totalorder %s37, 0
      %p150 = por %p148, %p149
      %p151 = scmp.ne.s32.totalorder %s137, %s138
      %p152 = scmp.eq.s32.totalorder %s38, 1
      %p153 = por %p151, %p152
      %p155 = scmp.ne.s32.totalorder %s138, %s154
      %p156 = scmp.eq.s32.totalorder %s38, 0
      %p157 = por %p155, %p156
      %s158 = ssub.s32 %s39, %s51
      %p159 = scmp.eq.s32.totalorder %s158, 0
      %s161 = sadd.s32 %s160, 1
      %s162 = scalar_select %p159, %s160, %s161
      %p165 = pneg %p159
      %p166 = scmp.eq.s32.totalorder %s32, 1
      %p167 = por %p165, %p166
      %p168 = scmp.ne.s32.totalorder %s160, %s163
      %p169 = scmp.eq.s32.totalorder %s32, 0
      %p170 = por %p168, %p169
      %p171 = scmp.ne.s32.totalorder %s160, %s163
      %p172 = scmp.eq.s32.totalorder %s37, 1
      %p173 = por %p171, %p172
      %p174 = scmp.ne.s32.totalorder %s163, %s164
      %p175 = scmp.eq.s32.totalorder %s37, 0
      %p176 = por %p174, %p175
      %p177 = scmp.ne.s32.totalorder %s163, %s164
      %p178 = scmp.eq.s32.totalorder %s38, 1
      %p179 = por %p177, %p178
      %p181 = scmp.ne.s32.totalorder %s164, %s180
      %p182 = scmp.eq.s32.totalorder %s38, 0
      %p183 = por %p181, %p182
      %s184 = ssub.s32 %s39, %s51
      %p185 = scmp.eq.s32.totalorder %s184, 0
      %s187 = sadd.s32 %s186, 1
      %s188 = scalar_select %p185, %s186, %s187
      %p191 = pneg %p185
      %p192 = scmp.eq.s32.totalorder %s32, 1
      %p193 = por %p191, %p192
      %p194 = scmp.ne.s32.totalorder %s186, %s189
      %p195 = scmp.eq.s32.totalorder %s32, 0
      %p196 = por %p194, %p195
      %p197 = scmp.ne.s32.totalorder %s186, %s189
      %p198 = scmp.eq.s32.totalorder %s37, 1
      %p199 = por %p197, %p198
      %p200 = scmp.ne.s32.totalorder %s189, %s190
      %p201 = scmp.eq.s32.totalorder %s37, 0
      %p202 = por %p200, %p201
      %p203 = scmp.ne.s32.totalorder %s189, %s190
      %p204 = scmp.eq.s32.totalorder %s38, 1
      %p205 = por %p203, %p204
      %p207 = scmp.ne.s32.totalorder %s190, %s206
      %p208 = scmp.eq.s32.totalorder %s38, 0
      %p209 = por %p207, %p208
      %s210 = ssub.s32 %s39, %s51
      %p211 = scmp.eq.s32.totalorder %s210, 0
      %s213 = sadd.s32 %s212, 1
      %s214 = scalar_select %p211, %s212, %s213
      %p217 = pneg %p211
      %p218 = scmp.eq.s32.totalorder %s32, 1
      %p219 = por %p217, %p218
      %p220 = scmp.ne.s32.totalorder %s212, %s215
      %p221 = scmp.eq.s32.totalorder %s32, 0
      %p222 = por %p220, %p221
      %p223 = scmp.ne.s32.totalorder %s212, %s215
      %p224 = scmp.eq.s32.totalorder %s37, 1
      %p225 = por %p223, %p224
      %p226 = scmp.ne.s32.totalorder %s215, %s216
      %p227 = scmp.eq.s32.totalorder %s37, 0
      %p228 = por %p226, %p227
      %p229 = scmp.ne.s32.totalorder %s215, %s216
      %p230 = scmp.eq.s32.totalorder %s38, 1
      %p231 = por %p229, %p230
      %p233 = scmp.ne.s32.totalorder %s216, %s232
      %p234 = scmp.eq.s32.totalorder %s38, 0
      %p235 = por %p233, %p234
      %s236 = ssub.s32 %s39, %s51
      %p237 = scmp.eq.s32.totalorder %s236, 0
      %s239 = sadd.s32 %s238, 1
      %s240 = scalar_select %p237, %s238, %s239
      %p243 = pneg %p237
      %p244 = scmp.eq.s32.totalorder %s32, 1
      %p245 = por %p243, %p244
      %p246 = scmp.ne.s32.totalorder %s238, %s241
      %p247 = scmp.eq.s32.totalorder %s32, 0
      %p248 = por %p246, %p247
      %p249 = scmp.ne.s32.totalorder %s238, %s241
      %p250 = scmp.eq.s32.totalorder %s37, 1
      %p251 = por %p249, %p250
      %p252 = scmp.ne.s32.totalorder %s241, %s242
      %p253 = scmp.eq.s32.totalorder %s37, 0
      %p254 = por %p252, %p253
      %p255 = scmp.ne.s32.totalorder %s241, %s242
      %p256 = scmp.eq.s32.totalorder %s38, 1
      %p257 = por %p255, %p256
      %p259 = scmp.ne.s32.totalorder %s242, %s258
      %p260 = scmp.eq.s32.totalorder %s38, 0
      %p261 = por %p259, %p260
      %s262 = ssub.s32 %s39, %s51
      %p263 = scmp.eq.s32.totalorder %s262, 0
      %s265 = sadd.s32 %s264, 1
      %s266 = scalar_select %p263, %s264, %s265
      %p269 = pneg %p263
      %p270 = scmp.eq.s32.totalorder %s32, 1
      %p271 = por %p269, %p270
      %p272 = scmp.ne.s32.totalorder %s264, %s267
      %p273 = scmp.eq.s32.totalorder %s32, 0
      %p274 = por %p272, %p273
      %p275 = scmp.ne.s32.totalorder %s264, %s267
      %p276 = scmp.eq.s32.totalorder %s37, 1
      %p277 = por %p275, %p276
      %p278 = scmp.ne.s32.totalorder %s267, %s268
      %p279 = scmp.eq.s32.totalorder %s37, 0
      %p280 = por %p278, %p279
      %p281 = scmp.ne.s32.totalorder %s267, %s268
      %p282 = scmp.eq.s32.totalorder %s38, 1
      %p283 = por %p281, %p282
      %p285 = scmp.ne.s32.totalorder %s268, %s284
      %p286 = scmp.eq.s32.totalorder %s38, 0
      %p287 = por %p285, %p286
      %s288 = ssub.s32 %s39, %s51
      %s289 = ssub.s32 %s40, %s47
      %s290 = sor.u32 %s288, %s289
      %p291 = scmp.eq.s32.totalorder %s290, 0
      %s293 = sadd.s32 %s292, 1
      %s294 = scalar_select %p291, %s292, %s293
      %p297 = pneg %p291
      %p298 = scmp.eq.s32.totalorder %s32, 1
      %p299 = por %p297, %p298
      %p300 = scmp.ne.s32.totalorder %s292, %s295
      %p301 = scmp.eq.s32.totalorder %s32, 0
      %p302 = por %p300, %p301
      %p303 = scmp.ne.s32.totalorder %s292, %s295
      %p304 = scmp.eq.s32.totalorder %s37, 1
      %p305 = por %p303, %p304
      %p306 = scmp.ne.s32.totalorder %s295, %s296
      %p307 = scmp.eq.s32.totalorder %s37, 0
      %p308 = por %p306, %p307
      %p309 = scmp.ne.s32.totalorder %s295, %s296
      %p310 = scmp.eq.s32.totalorder %s38, 1
      %p311 = por %p309, %p310
      %p313 = scmp.ne.s32.totalorder %s296, %s312
      %p314 = scmp.eq.s32.totalorder %s38, 0
      %p315 = por %p313, %p314
      %s316 = ssub.s32 %s39, %s51
      %s317 = ssub.s32 %s40, %s47
      %s318 = sor.u32 %s316, %s317
      %p319 = scmp.eq.s32.totalorder %s318, 0
      %s321 = sadd.s32 %s320, 1
      %s322 = scalar_select %p319, %s320, %s321
      %p325 = pneg %p319
      %p326 = scmp.eq.s32.totalorder %s32, 1
      %p327 = por %p325, %p326
      %p328 = scmp.ne.s32.totalorder %s320, %s323
      %p329 = scmp.eq.s32.totalorder %s32, 0
      %p330 = por %p328, %p329
      %p331 = scmp.ne.s32.totalorder %s320, %s323
      %p332 = scmp.eq.s32.totalorder %s37, 1
      %p333 = por %p331, %p332
      %p334 = scmp.ne.s32.totalorder %s323, %s324
      %p335 = scmp.eq.s32.totalorder %s37, 0
      %p336 = por %p334, %p335
      %p337 = scmp.ne.s32.totalorder %s323, %s324
      %p338 = scmp.eq.s32.totalorder %s38, 1
      %p339 = por %p337, %p338
      %p341 = scmp.ne.s32.totalorder %s324, %s340
      %p342 = scmp.eq.s32.totalorder %s38, 0
      %p343 = por %p341, %p342
      %p344 = scmp.le.s32.totalorder 1, %s32
      %p345 = scmp.lt.s32.totalorder %s32, 3
      %p346 = pnand %p344, %p345
      %p347 = pneg %p346
      // Predicated region
      $region9: #{tpu_custom_call.1} parent=5 // pred_check
        _
      $region10: #{tpu_custom_call.1} parent=5 // pred_check_branch
        %349 = sbr.rel (%p346) target = $region12
      $region11: #{tpu_custom_call.1} parent=5 // pred_region
        %s350 = ssub.s32 %s32, 1
      $region12: #{tpu_custom_call.1} parent=5 // pred_fallthru
        _
      %p351 = scmp.lt.s32.totalorder %s32, 2
      // Predicated region
      $region13: #{tpu_custom_call.1} parent=5 // pred_check
        %p352 = pneg %p351
      $region14: #{tpu_custom_call.1} parent=5 // pred_check_branch
        %354 = sbr.rel (%p352) target = $region16
      $region15: #{tpu_custom_call.1} parent=5 // pred_region
        // Predicated region
        $region17: #{tpu_custom_call.1} parent=15 // pred_check
          %p355 = pneg %p66
        $region18: #{tpu_custom_call.1} parent=15 // pred_check_branch
          %357 = sbr.rel (%p355) target = $region20
        $region19: #{tpu_custom_call.1} parent=15 // pred_region
          %s358 = sand.u32 %s56, 1
          %s359 = scalar_lea.sflag [#allocation3], %s358
          %s360 = sand.u32 %s56, 1
          %s361 = smul.addr %s360, 8
          %s362 = scalar_lea.vmem [#allocation2], %s361
          %s364 = ssub.s32 128, 128
          %365 = vsyncadd %s359, %s364
          %s366 = sadd.s32 %s40, %s39
          %s367 = smul.addr %s366, 128
          %s368 = scalar_lea.hbm %s0, %s367
          %s370 = sshll.u32 %s362, 4
          %s371 = int_to_ptr.vmem [resolvable:$true] %s370
          %373 = dma.hbm_to_vmem [thread:$0]  %s368, 128, %s371, %s359
        $region20: #{tpu_custom_call.1} parent=15 // pred_fallthru
          _
        // Predicated region
        $region21: #{tpu_custom_call.1} parent=15 // pred_check
          %p374 = pneg %p92
        $region22: #{tpu_custom_call.1} parent=15 // pred_check_branch
          %376 = sbr.rel (%p374) target = $region24
        $region23: #{tpu_custom_call.1} parent=15 // pred_region
          %s377 = sand.u32 %s32, 1
          %s378 = scalar_lea.sflag [#allocation6], %s377
          %s379 = sand.u32 %s82, 1
          %s380 = smul.addr %s379, 128
          %s381 = scalar_lea.vmem [#allocation5], %s380
          %s383 = ssub.s32 2048, 2048
          %384 = vsyncadd %s378, %s383
          %s385 = smul.addr %s39, 16
          %s386 = smul.addr %s385, 128
          %s387 = scalar_lea.hbm %s1, %s386
          %s388 = sshll.u32 %s381, 4
          %s389 = int_to_ptr.vmem [resolvable:$true] %s388
          %394 = dma.hbm_to_vmem [thread:$0]  %s387, 2048, %s389, %s378, 128, 128, 8
        $region24: #{tpu_custom_call.1} parent=15 // pred_fallthru
          _
        // Predicated region
        $region25: #{tpu_custom_call.1} parent=15 // pred_check
          %p395 = pneg %p118
        $region26: #{tpu_custom_call.1} parent=15 // pred_check_branch
          %397 = sbr.rel (%p395) target = $region28
        $region27: #{tpu_custom_call.1} parent=15 // pred_region
          %p398 = scmp.lt.s32.totalorder %s39, 1
          %s399 = scalar_select %p398, %s39, 1
          %s400 = scalar_lea.vmem %s2, %s399
        $region28: #{tpu_custom_call.1} parent=15 // pred_fallthru
          _
        // Predicated region
        $region29: #{tpu_custom_call.1} parent=15 // pred_check
          %p401 = pneg %p144
        $region30: #{tpu_custom_call.1} parent=15 // pred_check_branch
          %403 = sbr.rel (%p401) target = $region32
        $region31: #{tpu_custom_call.1} parent=15 // pred_region
          %s404 = sand.u32 %s32, 1
          %s405 = scalar_lea.sflag [#allocation6], %s404
          %s406 = sand.u32 %s134, 1
          %s407 = smul.addr %s406, 128
          %s408 = scalar_lea.vmem [#allocation7], %s407
          %s410 = ssub.s32 2048, 2048
          %411 = vsyncadd %s405, %s410
          %s412 = smul.addr %s39, 16
          %s413 = smul.addr %s412, 128
          %s414 = scalar_lea.hbm %s3, %s413
          %s415 = sshll.u32 %s408, 4
          %s416 = int_to_ptr.vmem [resolvable:$true] %s415
          %421 = dma.hbm_to_vmem [thread:$0]  %s414, 2048, %s416, %s405, 128, 128, 8
        $region32: #{tpu_custom_call.1} parent=15 // pred_fallthru
          _
        // Predicated region
        $region33: #{tpu_custom_call.1} parent=15 // pred_check
          %p422 = pneg %p170
        $region34: #{tpu_custom_call.1} parent=15 // pred_check_branch
          %424 = sbr.rel (%p422) target = $region36
        $region35: #{tpu_custom_call.1} parent=15 // pred_region
          %p425 = scmp.lt.s32.totalorder %s39, 1
          %s426 = scalar_select %p425, %s39, 1
          %s427 = scalar_lea.vmem %s4, %s426
        $region36: #{tpu_custom_call.1} parent=15 // pred_fallthru
          _
        // Predicated region
        $region37: #{tpu_custom_call.1} parent=15 // pred_check
          %p428 = pneg %p196
        $region38: #{tpu_custom_call.1} parent=15 // pred_check_branch
          %430 = sbr.rel (%p428) target = $region40
        $region39: #{tpu_custom_call.1} parent=15 // pred_region
          %s431 = sand.u32 %s32, 1
          %s432 = scalar_lea.sflag [#allocation9], %s431
          %s433 = sand.u32 %s186, 1
          %s434 = smul.addr %s433, 128
          %s435 = scalar_lea.vmem [#allocation8], %s434
          %s437 = ssub.s32 2048, 2048
          %438 = vsyncadd %s432, %s437
          %s439 = smul.addr %s39, 16
          %s440 = smul.addr %s439, 128
          %s441 = scalar_lea.hbm %s5, %s440
          %s442 = sshll.u32 %s435, 4
          %s443 = int_to_ptr.vmem [resolvable:$true] %s442
          %448 = dma.hbm_to_vmem [thread:$0]  %s441, 2048, %s443, %s432, 128, 128, 8
        $region40: #{tpu_custom_call.1} parent=15 // pred_fallthru
          _
        // Predicated region
        $region41: #{tpu_custom_call.1} parent=15 // pred_check
          %p449 = pneg %p222
        $region42: #{tpu_custom_call.1} parent=15 // pred_check_branch
          %451 = sbr.rel (%p449) target = $region44
        $region43: #{tpu_custom_call.1} parent=15 // pred_region
          %p452 = scmp.lt.s32.totalorder %s39, 1
          %s453 = scalar_select %p452, %s39, 1
          %s454 = scalar_lea.vmem %s6, %s453
        $region44: #{tpu_custom_call.1} parent=15 // pred_fallthru
          _
        // Predicated region
        $region45: #{tpu_custom_call.1} parent=15 // pred_check
          %p455 = pneg %p248
        $region46: #{tpu_custom_call.1} parent=15 // pred_check_branch
          %457 = sbr.rel (%p455) target = $region48
        $region47: #{tpu_custom_call.1} parent=15 // pred_region
          %s458 = sand.u32 %s32, 1
          %s459 = scalar_lea.sflag [#allocation9], %s458
          %s460 = sand.u32 %s238, 1
          %s461 = smul.addr %s460, 128
          %s462 = scalar_lea.vmem [#allocation10], %s461
          %s464 = ssub.s32 2048, 2048
          %465 = vsyncadd %s459, %s464
          %s466 = smul.addr %s39, 16
          %s467 = smul.addr %s466, 128
          %s468 = scalar_lea.hbm %s7, %s467
          %s469 = sshll.u32 %s462, 4
          %s470 = int_to_ptr.vmem [resolvable:$true] %s469
          %475 = dma.hbm_to_vmem [thread:$0]  %s468, 2048, %s470, %s459, 128, 128, 8
        $region48: #{tpu_custom_call.1} parent=15 // pred_fallthru
          _
        // Predicated region
        $region49: #{tpu_custom_call.1} parent=15 // pred_check
          %p476 = pneg %p274
        $region50: #{tpu_custom_call.1} parent=15 // pred_check_branch
          %478 = sbr.rel (%p476) target = $region52
        $region51: #{tpu_custom_call.1} parent=15 // pred_region
          %p479 = scmp.lt.s32.totalorder %s39, 1
          %s480 = scalar_select %p479, %s39, 1
          %s481 = scalar_lea.vmem %s8, %s480
        $region52: #{tpu_custom_call.1} parent=15 // pred_fallthru
          _
      $region16: #{tpu_custom_call.1} parent=5 // pred_fallthru
        _
      %p482 = scmp.le.s32.totalorder 1, %s32
      %p483 = scmp.lt.s32.totalorder %s32, 3
      %p484 = pnand %p482, %p483
      %p485 = pneg %p484
      // Predicated region
      $region53: #{tpu_custom_call.1} parent=5 // pred_check
        _
      $region54: #{tpu_custom_call.1} parent=5 // pred_check_branch
        %487 = sbr.rel (%p484) target = $region56
      $region55: #{tpu_custom_call.1} parent=5 // pred_region
        %s488 = ssub.s32 %s32, 1
        %s489 = sand.u32 %s59, 1
        %s490 = scalar_lea.sflag [#allocation3], %s489
        %s491 = sand.u32 %s59, 1
        %s492 = smul.addr %s491, 8
        %s493 = scalar_lea.vmem [#allocation2], %s492
        // Predicated region
        $region57: #{tpu_custom_call.1} parent=55 // pred_check
          %p494 = pneg %p72
        $region58: #{tpu_custom_call.1} parent=55 // pred_check_branch
          %496 = sbr.rel (%p494) target = $region60
        $region59: #{tpu_custom_call.1} parent=55 // pred_region
          %497 = dma.done %s490, 128
        $region60: #{tpu_custom_call.1} parent=55 // pred_fallthru
          _
        %s498 = sand.u32 %s37, 1
        %s499 = scalar_lea.sflag [#allocation6], %s498
        %s500 = sand.u32 %s85, 1
        %s501 = smul.addr %s500, 128
        %s502 = scalar_lea.vmem [#allocation5], %s501
        // Predicated region
        $region61: #{tpu_custom_call.1} parent=55 // pred_check
          %p503 = pneg %p98
        $region62: #{tpu_custom_call.1} parent=55 // pred_check_branch
          %505 = sbr.rel (%p503) target = $region64
        $region63: #{tpu_custom_call.1} parent=55 // pred_region
          %506 = dma.done %s499, 2048
        $region64: #{tpu_custom_call.1} parent=55 // pred_fallthru
          _
        %s507 = sand.u32 %s37, 1
        %s508 = scalar_lea.sflag [#allocation6], %s507
        %s509 = sand.u32 %s137, 1
        %s510 = smul.addr %s509, 128
        %s511 = scalar_lea.vmem [#allocation7], %s510
        // Predicated region
        $region65: #{tpu_custom_call.1} parent=55 // pred_check
          %p512 = pneg %p150
        $region66: #{tpu_custom_call.1} parent=55 // pred_check_branch
          %514 = sbr.rel (%p512) target = $region68
        $region67: #{tpu_custom_call.1} parent=55 // pred_region
          %515 = dma.done %s508, 2048
        $region68: #{tpu_custom_call.1} parent=55 // pred_fallthru
          _
        %s516 = sand.u32 %s37, 1
        %s517 = scalar_lea.sflag [#allocation9], %s516
        %s518 = sand.u32 %s189, 1
        %s519 = smul.addr %s518, 128
        %s520 = scalar_lea.vmem [#allocation8], %s519
        // Predicated region
        $region69: #{tpu_custom_call.1} parent=55 // pred_check
          %p521 = pneg %p202
        $region70: #{tpu_custom_call.1} parent=55 // pred_check_branch
          %523 = sbr.rel (%p521) target = $region72
        $region71: #{tpu_custom_call.1} parent=55 // pred_region
          %524 = dma.done %s517, 2048
        $region72: #{tpu_custom_call.1} parent=55 // pred_fallthru
          _
        %s525 = sand.u32 %s37, 1
        %s526 = scalar_lea.sflag [#allocation9], %s525
        %s527 = sand.u32 %s241, 1
        %s528 = smul.addr %s527, 128
        %s529 = scalar_lea.vmem [#allocation10], %s528
        // Predicated region
        $region73: #{tpu_custom_call.1} parent=55 // pred_check
          %p530 = pneg %p254
        $region74: #{tpu_custom_call.1} parent=55 // pred_check_branch
          %532 = sbr.rel (%p530) target = $region76
        $region75: #{tpu_custom_call.1} parent=55 // pred_region
          %533 = dma.done %s526, 2048
        $region76: #{tpu_custom_call.1} parent=55 // pred_fallthru
          _
        %s534 = sand.u32 %s59, 1
        %s535 = scalar_lea.sflag [#allocation3], %s534
        %s536 = sand.u32 %s59, 1
        %s537 = smul.addr %s536, 8
        %s538 = scalar_lea.vmem [#allocation2], %s537
        %p539 = pneg %p72
        %p540 = pneg %p69
        %s541 = sand.u32 %s37, 1
        %s542 = scalar_lea.sflag [#allocation6], %s541
        %s543 = sand.u32 %s85, 1
        %s544 = smul.addr %s543, 128
        %s545 = scalar_lea.vmem [#allocation5], %s544
        %p546 = pneg %p98
        %p547 = pneg %p95
        %p548 = scmp.lt.s32.totalorder %s41, 1
        %s549 = scalar_select %p548, %s41, 1
        %s550 = scalar_lea.vmem %s2, %s549
        %p551 = pneg %p124
        %p552 = pneg %p121
        %s553 = sand.u32 %s37, 1
        %s554 = scalar_lea.sflag [#allocation6], %s553
        %s555 = sand.u32 %s137, 1
        %s556 = smul.addr %s555, 128
        %s557 = scalar_lea.vmem [#allocation7], %s556
        %p558 = pneg %p150
        %p559 = pneg %p147
        %p560 = scmp.lt.s32.totalorder %s41, 1
        %s561 = scalar_select %p560, %s41, 1
        %s562 = scalar_lea.vmem %s4, %s561
        %p563 = pneg %p176
        %p564 = pneg %p173
        %s565 = sand.u32 %s37, 1
        %s566 = scalar_lea.sflag [#allocation9], %s565
        %s567 = sand.u32 %s189, 1
        %s568 = smul.addr %s567, 128
        %s569 = scalar_lea.vmem [#allocation8], %s568
        %p570 = pneg %p202
        %p571 = pneg %p199
        %p572 = scmp.lt.s32.totalorder %s41, 1
        %s573 = scalar_select %p572, %s41, 1
        %s574 = scalar_lea.vmem %s6, %s573
        %p575 = pneg %p228
        %p576 = pneg %p225
        %s577 = sand.u32 %s37, 1
        %s578 = scalar_lea.sflag [#allocation9], %s577
        %s579 = sand.u32 %s241, 1
        %s580 = smul.addr %s579, 128
        %s581 = scalar_lea.vmem [#allocation10], %s580
        %p582 = pneg %p254
        %p583 = pneg %p251
        %p584 = scmp.lt.s32.totalorder %s41, 1
        %s585 = scalar_select %p584, %s41, 1
        %s586 = scalar_lea.vmem %s8, %s585
        %p587 = pneg %p280
        %p588 = pneg %p277
        %p589 = pneg %p308
        %p590 = pneg %p305
        %s591 = sand.u32 %s295, 1
        %s592 = scalar_lea.sflag [#allocation4], %s591
        %s593 = sand.u32 %s295, 1
        %s594 = smul.addr %s593, 8
        %s595 = scalar_lea.vmem [#allocation11], %s594
        %p596 = pneg %p336
        %p597 = pneg %p333
        %s598 = sand.u32 %s323, 1
        %s599 = scalar_lea.sflag [#allocation13], %s598
        %s600 = sand.u32 %s323, 1
        %s601 = smul.addr %s600, 8
        %s602 = scalar_lea.vmem [#allocation12], %s601
        %p603 = scmp.lt.s32.totalorder %s41, 1
        %s604 = scalar_select %p603, %s41, 1
        %s605 = scalar_lea.vmem %s2, %s604
        %p606 = scmp.lt.s32.totalorder %s41, 1
        %s607 = scalar_select %p606, %s41, 1
        %s608 = scalar_lea.vmem %s4, %s607
        %p609 = scmp.lt.s32.totalorder %s41, 1
        %s610 = scalar_select %p609, %s41, 1
        %s611 = scalar_lea.vmem %s6, %s610
        %p612 = scmp.lt.s32.totalorder %s41, 1
        %s613 = scalar_select %p612, %s41, 1
        %s614 = scalar_lea.vmem %s8, %s613
        %v615 = vld [vmem:[%s493] sm:$0xff]
        %v616 = vld [vmem:[%s502] sm:$0xff]
        %v617 = vld [vmem:[%s502 + $0x8] sm:$0xff]
        %v618 = vld [vmem:[%s502 + $0x10] sm:$0xff]
        %v619 = vld [vmem:[%s502 + $0x18] sm:$0xff]
        %v620 = vld [vmem:[%s502 + $0x20] sm:$0xff]
        %v621 = vld [vmem:[%s502 + $0x28] sm:$0xff]
        %v622 = vld [vmem:[%s502 + $0x30] sm:$0xff]
        %v623 = vld [vmem:[%s502 + $0x38] sm:$0xff]
        %v624 = vld [vmem:[%s502 + $0x40] sm:$0xff]
        %v625 = vld [vmem:[%s502 + $0x48] sm:$0xff]
        %v626 = vld [vmem:[%s502 + $0x50] sm:$0xff]
        %v627 = vld [vmem:[%s502 + $0x58] sm:$0xff]
        %v628 = vld [vmem:[%s502 + $0x60] sm:$0xff]
        %v629 = vld [vmem:[%s502 + $0x68] sm:$0xff]
        %v630 = vld [vmem:[%s502 + $0x70] sm:$0xff]
        %v631 = vld [vmem:[%s502 + $0x78] sm:$0xff]
        %v632 = vld [vmem:[%s605] sm:$0x1]
        %v634 = vlaneseq
        %v635 = vshrl.u32 %v634, 7
        %v636 = vsub.s32 0, %v635
        %v637 = vrot.slane %v632, %v636
        %639 = vmatprep.subr.mxu0 0.0
        %640 = vmatpush1.msra.mxu0 %v616
        %641 = vmatprep.subr.mxu0 0.0
        %642 = vmatpush1.msra.mxu0 %v617
        %643 = vmatprep.subr.mxu0 0.0
        %644 = vmatpush1.msra.mxu0 %v618
        %645 = vmatprep.subr.mxu0 0.0
        %646 = vmatpush1.msra.mxu0 %v619
        %647 = vmatprep.subr.mxu0 0.0
        %648 = vmatpush1.msra.mxu0 %v620
        %649 = vmatprep.subr.mxu0 0.0
        %650 = vmatpush1.msra.mxu0 %v621
        %651 = vmatprep.subr.mxu0 0.0
        %652 = vmatpush1.msra.mxu0 %v622
        %653 = vmatprep.subr.mxu0 0.0
        %654 = vmatpush1.msra.mxu0 %v623
        %655 = vmatprep.subr.mxu0 0.0
        %656 = vmatpush1.msra.mxu0 %v624
        %657 = vmatprep.subr.mxu0 0.0
        %658 = vmatpush1.msra.mxu0 %v625
        %659 = vmatprep.subr.mxu0 0.0
        %660 = vmatpush1.msra.mxu0 %v626
        %661 = vmatprep.subr.mxu0 0.0
        %662 = vmatpush1.msra.mxu0 %v627
        %663 = vmatprep.subr.mxu0 0.0
        %664 = vmatpush1.msra.mxu0 %v628
        %665 = vmatprep.subr.mxu0 0.0
        %666 = vmatpush1.msra.mxu0 %v629
        %667 = vmatprep.subr.mxu0 0.0
        %668 = vmatpush1.msra.mxu0 %v630
        %669 = vmatprep.subr.mxu0 0.0
        %670 = vmatpush1.msra.mxu0 %v631
        %671 = vmatprep.subr.mxu0 0.0
        %672 = vmatpush1.msra.mxu0 0.0
        %673 = vmatprep.subr.mxu0 0.0
        %674 = vmatpush1.msra.mxu0 0.0
        %675 = vmatprep.subr.mxu0 0.0
        %676 = vmatpush1.msra.mxu0 0.0
        %677 = vmatprep.subr.mxu0 0.0
        %678 = vmatpush1.msra.mxu0 0.0
        %679 = vmatprep.subr.mxu0 0.0
        %680 = vmatpush1.msra.mxu0 0.0
        %681 = vmatprep.subr.mxu0 0.0
        %682 = vmatpush1.msra.mxu0 0.0
        %683 = vmatprep.subr.mxu0 0.0
        %684 = vmatpush1.msra.mxu0 0.0
        %685 = vmatprep.subr.mxu0 0.0
        %686 = vmatpush1.msra.mxu0 0.0
        %687 = vmatprep.subr.mxu0 0.0
        %688 = vmatpush1.msra.mxu0 0.0
        %689 = vmatprep.subr.mxu0 0.0
        %690 = vmatpush1.msra.mxu0 0.0
        %691 = vmatprep.subr.mxu0 0.0
        %692 = vmatpush1.msra.mxu0 0.0
        %693 = vmatprep.subr.mxu0 0.0
        %694 = vmatpush1.msra.mxu0 0.0
        %695 = vmatprep.subr.mxu0 0.0
        %696 = vmatpush1.msra.mxu0 0.0
        %697 = vmatprep.subr.mxu0 0.0
        %698 = vmatpush1.msra.mxu0 0.0
        %699 = vmatprep.subr.mxu0 0.0
        %700 = vmatpush1.msra.mxu0 0.0
        %701 = vmatprep.subr.mxu0 0.0
        %702 = vmatpush1.msra.mxu0 0.0
        %703 = vmatprep.mubr.f32.mxu0 0.0
        %704 = vmatmul.mubr.f32.gmra.mrb[0].mxu0 %v615
        %v705 = vpop.f32.mrb[0].mxu0
        %v706 = vadd.f32 %v637, %v705
        %v707 = vpop.f32.mrb[0].mxu0
        %708 = vdwg.mxu0
        %v709 = vxor.u32 %v706, 2147483648
        %v710 = vmul.f32 %v709, 1.442695
        %v711 = vpow.pop %v710
        %v712 = vadd.f32 %v711, 1.0
        %v713 = vrcp.pop %v712
        %v714 = vmul.f32 1.0, %v713
        %v715 = vmul.f32 %v706, %v714
        %v716 = vld [vmem:[%s511] sm:$0xff]
        %v717 = vld [vmem:[%s511 + $0x8] sm:$0xff]
        %v718 = vld [vmem:[%s511 + $0x10] sm:$0xff]
        %v719 = vld [vmem:[%s511 + $0x18] sm:$0xff]
        %v720 = vld [vmem:[%s511 + $0x20] sm:$0xff]
        %v721 = vld [vmem:[%s511 + $0x28] sm:$0xff]
        %v722 = vld [vmem:[%s511 + $0x30] sm:$0xff]
        %v723 = vld [vmem:[%s511 + $0x38] sm:$0xff]
        %v724 = vld [vmem:[%s511 + $0x40] sm:$0xff]
        %v725 = vld [vmem:[%s511 + $0x48] sm:$0xff]
        %v726 = vld [vmem:[%s511 + $0x50] sm:$0xff]
        %v727 = vld [vmem:[%s511 + $0x58] sm:$0xff]
        %v728 = vld [vmem:[%s511 + $0x60] sm:$0xff]
        %v729 = vld [vmem:[%s511 + $0x68] sm:$0xff]
        %v730 = vld [vmem:[%s511 + $0x70] sm:$0xff]
        %v731 = vld [vmem:[%s511 + $0x78] sm:$0xff]
        %v732 = vld [vmem:[%s608] sm:$0x1]
        %v734 = vlaneseq
        %v735 = vshrl.u32 %v734, 7
        %v736 = vsub.s32 0, %v735
        %v737 = vrot.slane %v732, %v736
        %739 = vmatprep.subr.mxu0 0.0
        %740 = vmatpush1.msra.mxu0 %v716
        %741 = vmatprep.subr.mxu0 0.0
        %742 = vmatpush1.msra.mxu0 %v717
        %743 = vmatprep.subr.mxu0 0.0
        %744 = vmatpush1.msra.mxu0 %v718
        %745 = vmatprep.subr.mxu0 0.0
        %746 = vmatpush1.msra.mxu0 %v719
        %747 = vmatprep.subr.mxu0 0.0
        %748 = vmatpush1.msra.mxu0 %v720
        %749 = vmatprep.subr.mxu0 0.0
        %750 = vmatpush1.msra.mxu0 %v721
        %751 = vmatprep.subr.mxu0 0.0
        %752 = vmatpush1.msra.mxu0 %v722
        %753 = vmatprep.subr.mxu0 0.0
        %754 = vmatpush1.msra.mxu0 %v723
        %755 = vmatprep.subr.mxu0 0.0
        %756 = vmatpush1.msra.mxu0 %v724
        %757 = vmatprep.subr.mxu0 0.0
        %758 = vmatpush1.msra.mxu0 %v725
        %759 = vmatprep.subr.mxu0 0.0
        %760 = vmatpush1.msra.mxu0 %v726
        %761 = vmatprep.subr.mxu0 0.0
        %762 = vmatpush1.msra.mxu0 %v727
        %763 = vmatprep.subr.mxu0 0.0
        %764 = vmatpush1.msra.mxu0 %v728
        %765 = vmatprep.subr.mxu0 0.0
        %766 = vmatpush1.msra.mxu0 %v729
        %767 = vmatprep.subr.mxu0 0.0
        %768 = vmatpush1.msra.mxu0 %v730
        %769 = vmatprep.subr.mxu0 0.0
        %770 = vmatpush1.msra.mxu0 %v731
        %771 = vmatprep.subr.mxu0 0.0
        %772 = vmatpush1.msra.mxu0 0.0
        %773 = vmatprep.subr.mxu0 0.0
        %774 = vmatpush1.msra.mxu0 0.0
        %775 = vmatprep.subr.mxu0 0.0
        %776 = vmatpush1.msra.mxu0 0.0
        %777 = vmatprep.subr.mxu0 0.0
        %778 = vmatpush1.msra.mxu0 0.0
        %779 = vmatprep.subr.mxu0 0.0
        %780 = vmatpush1.msra.mxu0 0.0
        %781 = vmatprep.subr.mxu0 0.0
        %782 = vmatpush1.msra.mxu0 0.0
        %783 = vmatprep.subr.mxu0 0.0
        %784 = vmatpush1.msra.mxu0 0.0
        %785 = vmatprep.subr.mxu0 0.0
        %786 = vmatpush1.msra.mxu0 0.0
        %787 = vmatprep.subr.mxu0 0.0
        %788 = vmatpush1.msra.mxu0 0.0
        %789 = vmatprep.subr.mxu0 0.0
        %790 = vmatpush1.msra.mxu0 0.0
        %791 = vmatprep.subr.mxu0 0.0
        %792 = vmatpush1.msra.mxu0 0.0
        %793 = vmatprep.subr.mxu0 0.0
        %794 = vmatpush1.msra.mxu0 0.0
        %795 = vmatprep.subr.mxu0 0.0
        %796 = vmatpush1.msra.mxu0 0.0
        %797 = vmatprep.subr.mxu0 0.0
        %798 = vmatpush1.msra.mxu0 0.0
        %799 = vmatprep.subr.mxu0 0.0
        %800 = vmatpush1.msra.mxu0 0.0
        %801 = vmatprep.subr.mxu0 0.0
        %802 = vmatpush1.msra.mxu0 0.0
        %803 = vmatprep.mubr.f32.mxu0 0.0
        %804 = vmatmul.mubr.f32.gmra.mrb[0].mxu0 %v715
        %v805 = vpop.f32.mrb[0].mxu0
        %v806 = vadd.f32 %v737, %v805
        %v807 = vpop.f32.mrb[0].mxu0
        %808 = vdwg.mxu0
        %809 = vst [vmem:[%s595] sm:$0xff] %v806
        %v810 = vld [vmem:[%s520] sm:$0xff]
        %v811 = vld [vmem:[%s520 + $0x8] sm:$0xff]
        %v812 = vld [vmem:[%s520 + $0x10] sm:$0xff]
        %v813 = vld [vmem:[%s520 + $0x18] sm:$0xff]
        %v814 = vld [vmem:[%s520 + $0x20] sm:$0xff]
        %v815 = vld [vmem:[%s520 + $0x28] sm:$0xff]
        %v816 = vld [vmem:[%s520 + $0x30] sm:$0xff]
        %v817 = vld [vmem:[%s520 + $0x38] sm:$0xff]
        %v818 = vld [vmem:[%s520 + $0x40] sm:$0xff]
        %v819 = vld [vmem:[%s520 + $0x48] sm:$0xff]
        %v820 = vld [vmem:[%s520 + $0x50] sm:$0xff]
        %v821 = vld [vmem:[%s520 + $0x58] sm:$0xff]
        %v822 = vld [vmem:[%s520 + $0x60] sm:$0xff]
        %v823 = vld [vmem:[%s520 + $0x68] sm:$0xff]
        %v824 = vld [vmem:[%s520 + $0x70] sm:$0xff]
        %v825 = vld [vmem:[%s520 + $0x78] sm:$0xff]
        %v826 = vld [vmem:[%s611] sm:$0x1]
        %v828 = vlaneseq
        %v829 = vshrl.u32 %v828, 7
        %v830 = vsub.s32 0, %v829
        %v831 = vrot.slane %v826, %v830
        %833 = vmatprep.subr.mxu0 0.0
        %834 = vmatpush1.msra.mxu0 %v810
        %835 = vmatprep.subr.mxu0 0.0
        %836 = vmatpush1.msra.mxu0 %v811
        %837 = vmatprep.subr.mxu0 0.0
        %838 = vmatpush1.msra.mxu0 %v812
        %839 = vmatprep.subr.mxu0 0.0
        %840 = vmatpush1.msra.mxu0 %v813
        %841 = vmatprep.subr.mxu0 0.0
        %842 = vmatpush1.msra.mxu0 %v814
        %843 = vmatprep.subr.mxu0 0.0
        %844 = vmatpush1.msra.mxu0 %v815
        %845 = vmatprep.subr.mxu0 0.0
        %846 = vmatpush1.msra.mxu0 %v816
        %847 = vmatprep.subr.mxu0 0.0
        %848 = vmatpush1.msra.mxu0 %v817
        %849 = vmatprep.subr.mxu0 0.0
        %850 = vmatpush1.msra.mxu0 %v818
        %851 = vmatprep.subr.mxu0 0.0
        %852 = vmatpush1.msra.mxu0 %v819
        %853 = vmatprep.subr.mxu0 0.0
        %854 = vmatpush1.msra.mxu0 %v820
        %855 = vmatprep.subr.mxu0 0.0
        %856 = vmatpush1.msra.mxu0 %v821
        %857 = vmatprep.subr.mxu0 0.0
        %858 = vmatpush1.msra.mxu0 %v822
        %859 = vmatprep.subr.mxu0 0.0
        %860 = vmatpush1.msra.mxu0 %v823
        %861 = vmatprep.subr.mxu0 0.0
        %862 = vmatpush1.msra.mxu0 %v824
        %863 = vmatprep.subr.mxu0 0.0
        %864 = vmatpush1.msra.mxu0 %v825
        %865 = vmatprep.subr.mxu0 0.0
        %866 = vmatpush1.msra.mxu0 0.0
        %867 = vmatprep.subr.mxu0 0.0
        %868 = vmatpush1.msra.mxu0 0.0
        %869 = vmatprep.subr.mxu0 0.0
        %870 = vmatpush1.msra.mxu0 0.0
        %871 = vmatprep.subr.mxu0 0.0
        %872 = vmatpush1.msra.mxu0 0.0
        %873 = vmatprep.subr.mxu0 0.0
        %874 = vmatpush1.msra.mxu0 0.0
        %875 = vmatprep.subr.mxu0 0.0
        %876 = vmatpush1.msra.mxu0 0.0
        %877 = vmatprep.subr.mxu0 0.0
        %878 = vmatpush1.msra.mxu0 0.0
        %879 = vmatprep.subr.mxu0 0.0
        %880 = vmatpush1.msra.mxu0 0.0
        %881 = vmatprep.subr.mxu0 0.0
        %882 = vmatpush1.msra.mxu0 0.0
        %883 = vmatprep.subr.mxu0 0.0
        %884 = vmatpush1.msra.mxu0 0.0
        %885 = vmatprep.subr.mxu0 0.0
        %886 = vmatpush1.msra.mxu0 0.0
        %887 = vmatprep.subr.mxu0 0.0
        %888 = vmatpush1.msra.mxu0 0.0
        %889 = vmatprep.subr.mxu0 0.0
        %890 = vmatpush1.msra.mxu0 0.0
        %891 = vmatprep.subr.mxu0 0.0
        %892 = vmatpush1.msra.mxu0 0.0
        %893 = vmatprep.subr.mxu0 0.0
        %894 = vmatpush1.msra.mxu0 0.0
        %895 = vmatprep.subr.mxu0 0.0
        %896 = vmatpush1.msra.mxu0 0.0
        %897 = vmatprep.mubr.f32.mxu0 0.0
        %898 = vmatmul.mubr.f32.gmra.mrb[0].mxu0 %v806
        %v899 = vpop.f32.mrb[0].mxu0
        %v900 = vadd.f32 %v831, %v899
        %v901 = vpop.f32.mrb[0].mxu0
        %902 = vdwg.mxu0
        %v903 = vxor.u32 %v900, 2147483648
        %v904 = vmul.f32 %v903, 1.442695
        %v905 = vpow.pop %v904
        %v906 = vadd.f32 %v905, 1.0
        %v907 = vrcp.pop %v906
        %v908 = vmul.f32 1.0, %v907
        %v909 = vmul.f32 %v900, %v908
        %v910 = vld [vmem:[%s529] sm:$0xff]
        %v911 = vld [vmem:[%s529 + $0x8] sm:$0xff]
        %v912 = vld [vmem:[%s529 + $0x10] sm:$0xff]
        %v913 = vld [vmem:[%s529 + $0x18] sm:$0xff]
        %v914 = vld [vmem:[%s529 + $0x20] sm:$0xff]
        %v915 = vld [vmem:[%s529 + $0x28] sm:$0xff]
        %v916 = vld [vmem:[%s529 + $0x30] sm:$0xff]
        %v917 = vld [vmem:[%s529 + $0x38] sm:$0xff]
        %v918 = vld [vmem:[%s529 + $0x40] sm:$0xff]
        %v919 = vld [vmem:[%s529 + $0x48] sm:$0xff]
        %v920 = vld [vmem:[%s529 + $0x50] sm:$0xff]
        %v921 = vld [vmem:[%s529 + $0x58] sm:$0xff]
        %v922 = vld [vmem:[%s529 + $0x60] sm:$0xff]
        %v923 = vld [vmem:[%s529 + $0x68] sm:$0xff]
        %v924 = vld [vmem:[%s529 + $0x70] sm:$0xff]
        %v925 = vld [vmem:[%s529 + $0x78] sm:$0xff]
        %v926 = vld [vmem:[%s614] sm:$0x1]
        %v928 = vlaneseq
        %v929 = vshrl.u32 %v928, 7
        %v930 = vsub.s32 0, %v929
        %v931 = vrot.slane %v926, %v930
        %933 = vmatprep.subr.mxu0 0.0
        %934 = vmatpush1.msra.mxu0 %v910
        %935 = vmatprep.subr.mxu0 0.0
        %936 = vmatpush1.msra.mxu0 %v911
        %937 = vmatprep.subr.mxu0 0.0
        %938 = vmatpush1.msra.mxu0 %v912
        %939 = vmatprep.subr.mxu0 0.0
        %940 = vmatpush1.msra.mxu0 %v913
        %941 = vmatprep.subr.mxu0 0.0
        %942 = vmatpush1.msra.mxu0 %v914
        %943 = vmatprep.subr.mxu0 0.0
        %944 = vmatpush1.msra.mxu0 %v915
        %945 = vmatprep.subr.mxu0 0.0
        %946 = vmatpush1.msra.mxu0 %v916
        %947 = vmatprep.subr.mxu0 0.0
        %948 = vmatpush1.msra.mxu0 %v917
        %949 = vmatprep.subr.mxu0 0.0
        %950 = vmatpush1.msra.mxu0 %v918
        %951 = vmatprep.subr.mxu0 0.0
        %952 = vmatpush1.msra.mxu0 %v919
        %953 = vmatprep.subr.mxu0 0.0
        %954 = vmatpush1.msra.mxu0 %v920
        %955 = vmatprep.subr.mxu0 0.0
        %956 = vmatpush1.msra.mxu0 %v921
        %957 = vmatprep.subr.mxu0 0.0
        %958 = vmatpush1.msra.mxu0 %v922
        %959 = vmatprep.subr.mxu0 0.0
        %960 = vmatpush1.msra.mxu0 %v923
        %961 = vmatprep.subr.mxu0 0.0
        %962 = vmatpush1.msra.mxu0 %v924
        %963 = vmatprep.subr.mxu0 0.0
        %964 = vmatpush1.msra.mxu0 %v925
        %965 = vmatprep.subr.mxu0 0.0
        %966 = vmatpush1.msra.mxu0 0.0
        %967 = vmatprep.subr.mxu0 0.0
        %968 = vmatpush1.msra.mxu0 0.0
        %969 = vmatprep.subr.mxu0 0.0
        %970 = vmatpush1.msra.mxu0 0.0
        %971 = vmatprep.subr.mxu0 0.0
        %972 = vmatpush1.msra.mxu0 0.0
        %973 = vmatprep.subr.mxu0 0.0
        %974 = vmatpush1.msra.mxu0 0.0
        %975 = vmatprep.subr.mxu0 0.0
        %976 = vmatpush1.msra.mxu0 0.0
        %977 = vmatprep.subr.mxu0 0.0
        %978 = vmatpush1.msra.mxu0 0.0
        %979 = vmatprep.subr.mxu0 0.0
        %980 = vmatpush1.msra.mxu0 0.0
        %981 = vmatprep.subr.mxu0 0.0
        %982 = vmatpush1.msra.mxu0 0.0
        %983 = vmatprep.subr.mxu0 0.0
        %984 = vmatpush1.msra.mxu0 0.0
        %985 = vmatprep.subr.mxu0 0.0
        %986 = vmatpush1.msra.mxu0 0.0
        %987 = vmatprep.subr.mxu0 0.0
        %988 = vmatpush1.msra.mxu0 0.0
        %989 = vmatprep.subr.mxu0 0.0
        %990 = vmatpush1.msra.mxu0 0.0
        %991 = vmatprep.subr.mxu0 0.0
        %992 = vmatpush1.msra.mxu0 0.0
        %993 = vmatprep.subr.mxu0 0.0
        %994 = vmatpush1.msra.mxu0 0.0
        %995 = vmatprep.subr.mxu0 0.0
        %996 = vmatpush1.msra.mxu0 0.0
        %997 = vmatprep.mubr.f32.mxu0 0.0
        %998 = vmatmul.mubr.f32.gmra.mrb[0].mxu0 %v909
        %v999 = vpop.f32.mrb[0].mxu0
        %v1000 = vadd.f32 %v931, %v999
        %v1001 = vpop.f32.mrb[0].mxu0
        %1002 = vdwg.mxu0
        %1003 = vst [vmem:[%s602] sm:$0xff] %v1000
        %s1004 = sand.u32 %s295, 1
        %s1005 = scalar_lea.sflag [#allocation4], %s1004
        %s1006 = sand.u32 %s295, 1
        %s1007 = smul.addr %s1006, 8
        %s1008 = scalar_lea.vmem [#allocation11], %s1007
        %s1009 = sand.u32 %s323, 1
        %s1010 = scalar_lea.sflag [#allocation13], %s1009
        %s1011 = sand.u32 %s323, 1
        %s1012 = smul.addr %s1011, 8
        %s1013 = scalar_lea.vmem [#allocation12], %s1012
        // Predicated region
        $region77: #{tpu_custom_call.1} parent=55 // pred_check
          %p1014 = pneg %p305
        $region78: #{tpu_custom_call.1} parent=55 // pred_check_branch
          %1016 = sbr.rel (%p1014) target = $region80
        $region79: #{tpu_custom_call.1} parent=55 // pred_region
          %s1018 = ssub.s32 128, 128
          %1019 = vsyncadd %s1005, %s1018
          %s1020 = sadd.s32 %s42, %s41
          %s1021 = smul.addr %s1020, 128
          %s1022 = scalar_lea.hbm %s9, %s1021
          %s1024 = sshll.u32 %s1008, 4
          %s1025 = int_to_ptr.vmem [resolvable:$true] %s1024
          %1027 = dma.vmem_to_hbm [thread:$0]  %s1025, 128, %s1022, %s1005
        $region80: #{tpu_custom_call.1} parent=55 // pred_fallthru
          _
        // Predicated region
        $region81: #{tpu_custom_call.1} parent=55 // pred_check
          %p1028 = pneg %p333
        $region82: #{tpu_custom_call.1} parent=55 // pred_check_branch
          %1030 = sbr.rel (%p1028) target = $region84
        $region83: #{tpu_custom_call.1} parent=55 // pred_region
          %s1032 = ssub.s32 128, 128
          %1033 = vsyncadd %s1010, %s1032
          %s1034 = sadd.s32 %s42, %s41
          %s1035 = smul.addr %s1034, 128
          %s1036 = scalar_lea.hbm %s10, %s1035
          %s1038 = sshll.u32 %s1013, 4
          %s1039 = int_to_ptr.vmem [resolvable:$true] %s1038
          %1041 = dma.vmem_to_hbm [thread:$0]  %s1039, 128, %s1036, %s1010
        $region84: #{tpu_custom_call.1} parent=55 // pred_fallthru
          _
      $region56: #{tpu_custom_call.1} parent=5 // pred_fallthru
        _
      %p1042 = scmp.le.s32.totalorder 2, %s32
      // Predicated region
      $region85: #{tpu_custom_call.1} parent=5 // pred_check
        %p1043 = pneg %p1042
      $region86: #{tpu_custom_call.1} parent=5 // pred_check_branch
        %1045 = sbr.rel (%p1043) target = $region88
      $region87: #{tpu_custom_call.1} parent=5 // pred_region
        %s1046 = ssub.s32 %s32, 2
        // Predicated region
        $region89: #{tpu_custom_call.1} parent=87 // pred_check
          %p1047 = pneg %p311
        $region90: #{tpu_custom_call.1} parent=87 // pred_check_branch
          %1049 = sbr.rel (%p1047) target = $region92
        $region91: #{tpu_custom_call.1} parent=87 // pred_region
          %s1050 = sand.u32 %s296, 1
          %s1051 = scalar_lea.sflag [#allocation4], %s1050
          %s1052 = sand.u32 %s296, 1
          %s1053 = smul.addr %s1052, 8
          %s1054 = scalar_lea.vmem [#allocation11], %s1053
          %1055 = dma.done %s1051, 128
        $region92: #{tpu_custom_call.1} parent=87 // pred_fallthru
          _
        // Predicated region
        $region93: #{tpu_custom_call.1} parent=87 // pred_check
          %p1056 = pneg %p339
        $region94: #{tpu_custom_call.1} parent=87 // pred_check_branch
          %1058 = sbr.rel (%p1056) target = $region96
        $region95: #{tpu_custom_call.1} parent=87 // pred_region
          %s1059 = sand.u32 %s324, 1
          %s1060 = scalar_lea.sflag [#allocation13], %s1059
          %s1061 = sand.u32 %s324, 1
          %s1062 = smul.addr %s1061, 8
          %s1063 = scalar_lea.vmem [#allocation12], %s1062
          %1064 = dma.done %s1060, 128
        $region96: #{tpu_custom_call.1} parent=87 // pred_fallthru
          _
      $region88: #{tpu_custom_call.1} parent=5 // pred_fallthru
        _
    $region6: #{tpu_custom_call.1} parent=1 // loop_footer
      %s36 = sadd.s32 1, %s32
    $region7: #{tpu_custom_call.1} parent=1 // loop_footer_branch
      %31 = sbr.rel target = $region3
    $region8: #{tpu_custom_call.1} parent=1 // loop_exit
      _
    %1065 = vsyncpa [#allocation3], 1
    %s1066 = scalar_lea.sflag [#allocation3], 1
    %1067 = vsyncpa %s1066, 1
    %1068 = vsyncpa [#allocation6], 1
    %s1069 = scalar_lea.sflag [#allocation6], 1
    %1070 = vsyncpa %s1069, 1
    %1071 = vsyncpa [#allocation9], 1
    %s1072 = scalar_lea.sflag [#allocation9], 1
    %1073 = vsyncpa %s1072, 1
    %1074 = vsyncpa [#allocation4], 1
    %s1075 = scalar_lea.sflag [#allocation4], 1
    %1076 = vsyncpa %s1075, 1
    %1077 = vsyncpa [#allocation13], 1
    %s1078 = scalar_lea.sflag [#allocation13], 1
    %1079 = vsyncpa %s1078, 1

</llo_original>
